<compile_context>
chip_gen: v5e
topology: v5e:2x2
jax: 0.10.0
libtpu: 0.0.40
codegen_flags: <defaults>
</compile_context>

<pallas_src>
import functools

import jax
import jax.numpy as jnp
from jax.experimental import pallas as pl
from jax.experimental.pallas import tpu as pltpu

_LANE = 128


def _round_up(x, m):
    return (x + m - 1) // m * m


def _sublane(dtype):
    d = jnp.dtype(dtype)
    if d.itemsize == 2:
        return 16
    if d.itemsize == 1:
        return 32
    return 8


def _vmem_budget_bytes():
    """Per-generation VMEM budget with headroom (v5e/v6e: 128 MiB, v7x: 64 MiB)."""
    try:
        cap = int(pltpu.get_tpu_info().vmem_capacity_bytes)
    except Exception:
        cap = 64 * 1024 * 1024  # conservative: v7x physical VMEM
    return max(32 * 1024 * 1024, min(cap - 16 * 1024 * 1024, 100 * 1024 * 1024))


def _pick_tile(total, want):
    """Largest multiple of 128 that divides `total` (a 128-multiple) and is <= want."""
    t = min(_round_up(want, _LANE), total)
    t = (t // _LANE) * _LANE
    while total % t != 0:
        t -= _LANE
    return t


def _tile_vmem_bytes(tm_e, tn_e, tk_e, in_itemsize, out_itemsize):
    # Double-buffered input/output blocks + f32 accumulator scratch.
    return (2 * tm_e * tk_e * in_itemsize        # x block
            + 2 * tk_e * tn_e * in_itemsize      # w block (dominant stream)
            + 2 * tn_e * in_itemsize             # bias block
            + 2 * tm_e * tn_e * out_itemsize     # output block
            + tm_e * tn_e * 4)                   # f32 accumulator


def _linear_kernel(x_ref, w_ref, b_ref, o_ref, acc_ref):
    # x_ref: (tm, tk), w_ref: (tk, tn), b_ref: (1, tn), o_ref: (tm, tn)
    k = pl.program_id(2)

    @pl.when(k == 0)
    def _():
        # Fold the bias into the accumulator init -> epilogue is a pure cast+store.
        acc_ref[...] = jnp.broadcast_to(
            b_ref[...].astype(jnp.float32), acc_ref.shape)

    acc_ref[...] += jnp.dot(x_ref[...], w_ref[...],
                            preferred_element_type=jnp.float32)

    @pl.when(k == pl.num_programs(2) - 1)
    def _():
        o_ref[...] = acc_ref[...].astype(o_ref.dtype)


def pallas_linear(x, w_p, b_p, *, n_out, tm_cap=512, tn=512, tk=1024):
    """x: (M, K); w_p: (K_p, N_p) pre-transposed & pre-padded weight; b_p: (1, N_p)."""
    M, K = x.shape
    K_p, N_p = w_p.shape
    assert K <= K_p and b_p.shape == (1, N_p)

    in_b = jnp.dtype(x.dtype).itemsize
    out_b = in_b
    sub = _sublane(x.dtype)

    # Collapse the M grid for small batches so each weight block is streamed
    # from HBM exactly once (weight traffic = K*N); fall back to tm_cap tiles.
    M_sub = _round_up(M, sub)
    tm_e = M_sub if M_sub <= tm_cap else _round_up(tm_cap, sub)
    M_pad = _round_up(M, tm_e)

    tn_e = _pick_tile(N_p, tn)
    tk_e = _pick_tile(K_p, tk)

    # Megacore: with a single M block, the "parallel" N axis is the only
    # source of cross-TensorCore work -> prefer >= 2 N blocks when possible.
    if M_pad == tm_e and tn_e == N_p and N_p >= 2 * _LANE:
        tn_e = _pick_tile(N_p, N_p // 2)

    # Keep the tile plan inside the per-generation VMEM budget.
    budget = _vmem_budget_bytes()
    while (_tile_vmem_bytes(tm_e, tn_e, tk_e, in_b, out_b) > budget
           and tk_e > _LANE):
        tk_e = _pick_tile(K_p, tk_e - _LANE)
    while (_tile_vmem_bytes(tm_e, tn_e, tk_e, in_b, out_b) > budget
           and tn_e > _LANE):
        tn_e = _pick_tile(N_p, tn_e - _LANE)

    # Only the (small) activation is padded in the hot path; weight and bias
    # were padded once in prepare_params.  Zero-padding K is exact.
    if (M_pad, K_p) != (M, K):
        x = jnp.pad(x, ((0, M_pad - M), (0, K_p - K)))

    grid = (M_pad // tm_e, N_p // tn_e, K_p // tk_e)

    cost = pl.CostEstimate(
        flops=2 * M_pad * N_p * K_p,
        bytes_accessed=in_b * (M_pad * K_p + K_p * N_p + N_p)
        + out_b * M_pad * N_p,
        transcendentals=0)

    out_p = pl.pallas_call(
        _linear_kernel,
        out_shape=jax.ShapeDtypeStruct((M_pad, N_p), x.dtype),
        grid_spec=pltpu.PrefetchScalarGridSpec(
            num_scalar_prefetch=0,
            grid=grid,
            in_specs=[
                pl.BlockSpec((tm_e, tk_e), lambda i, j, k: (i, k)),
                pl.BlockSpec((tk_e, tn_e), lambda i, j, k: (k, j)),
                pl.BlockSpec((1, tn_e), lambda i, j, k: (0, j)),
            ],
            out_specs=pl.BlockSpec((tm_e, tn_e), lambda i, j, k: (i, j)),
            scratch_shapes=[pltpu.VMEM((tm_e, tn_e), jnp.float32)],
        ),
        compiler_params=pltpu.CompilerParams(
            dimension_semantics=("parallel", "parallel", "arbitrary"),
            vmem_limit_bytes=int(budget),
        ),
        cost_estimate=cost,
    )(x, w_p, b_p)

    return out_p[:M, :n_out]


# Whole forward (activation pad + kernel + slice) compiled as one program.
linear_apply = jax.jit(pallas_linear,
                       static_argnames=("n_out", "tm_cap", "tn", "tk"))


def prepare_params(weight, bias, dtype=jnp.float32):
    """One-time parameter prep (outside the hot path).

    PyTorch (D_out, D_in) weight -> transposed AND lane-padded (K_p, N_p), so
    the per-call forward never re-pads the weight (a full HBM read+write).
    Pass dtype=jnp.bfloat16 for bf16 weights with f32 accumulation.
    """
    w_t = jnp.asarray(weight, dtype=dtype).T          # (K, N)
    b = jnp.asarray(bias, dtype=dtype)
    K, N = w_t.shape
    K_p, N_p = _round_up(K, _LANE), _round_up(N, _LANE)
    if (K_p, N_p) != (K, N):
        w_t = jnp.pad(w_t, ((0, K_p - K), (0, N_p - N)))
    if N_p != N:
        b = jnp.pad(b, (0, N_p - N))
    return w_t, b.reshape(1, N_p), N


if __name__ == "__main__":
    # Small shapes consistent with the module: batch=8, input_size=32, output_size=16.
    B, D_in, D_out = 8, 32, 16

    key = jax.random.PRNGKey(0)
    kx, kw, kb = jax.random.split(key, 3)

    x = jax.random.normal(kx, (B, D_in), dtype=jnp.float32)
    # Deterministic init mimicking nn.Linear's uniform(-1/sqrt(fan_in), 1/sqrt(fan_in))
    bound = 1.0 / jnp.sqrt(jnp.float32(D_in))
    weight = jax.random.uniform(kw, (D_out, D_in), minval=-bound, maxval=bound,
                                dtype=jnp.float32)
    bias = jax.random.uniform(kb, (D_out,), minval=-bound, maxval=bound,
                              dtype=jnp.float32)

    # TODO(synk): the in-forward `print('\tIn Model: ...')` debug side-effect is omitted.
    w_p, b_p, n_out = prepare_params(weight, bias)

    out = linear_apply(x, w_p, b_p, n_out=n_out)
    out = jax.block_until_ready(out)

    # Reference check against plain JAX
    ref = x @ weight.T + bias
    assert out.shape == (B, D_out)
    assert jnp.allclose(out, ref, atol=1e-5, rtol=1e-5), "mismatch vs reference"

    print("KERNEL_OK")
</pallas_src>

<mosaic_0001>
module attributes {stable_mosaic.version = 11 : i64} {
  func.func @_linear_kernel(%arg0: i32, %arg1: i32, %arg2: i32, %arg3: memref<8x128xf32, #tpu.memory_space<vmem>>, %arg4: memref<128x128xf32, #tpu.memory_space<vmem>>, %arg5: memref<1x128xf32, #tpu.memory_space<vmem>>, %arg6: memref<8x128xf32, #tpu.memory_space<vmem>>, %arg7: memref<8x128xf32, #tpu.memory_space<vmem>>) attributes {dimension_semantics = [#tpu.dimension_semantics<parallel>, #tpu.dimension_semantics<parallel>, #tpu.dimension_semantics<arbitrary>], iteration_bounds = array<i64: 1, 1, 1>, scalar_prefetch = 0 : i64, scratch_operands = 1 : i64, tpu.core_type = #tpu.core_type<tc>, window_params = [{transform_indices = @transform_0, window_bounds = array<i64: 8, 128>}, {transform_indices = @transform_1, window_bounds = array<i64: 128, 128>}, {transform_indices = @transform_2, window_bounds = array<i64: 1, 128>}, {transform_indices = @transform_3, window_bounds = array<i64: 8, 128>}]} {
    %c0_i32 = arith.constant 0 : i32
    %0 = arith.cmpi eq, %arg2, %c0_i32 : i32
    %1 = arith.extui %0 : i1 to i32
    %c0_i32_0 = arith.constant 0 : i32
    %2 = arith.cmpi ne, %1, %c0_i32_0 : i32
    scf.if %2 {
      %c0_10 = arith.constant 0 : index
      %c0_11 = arith.constant 0 : index
      %12 = vector.load %arg5[%c0_10, %c0_11] : memref<1x128xf32, #tpu.memory_space<vmem>>, vector<1x128xf32>
      %13 = vector.shape_cast %12 : vector<1x128xf32> to vector<1x128xf32>
      %14 = vector.broadcast %13 : vector<1x128xf32> to vector<8x128xf32>
      %c0_12 = arith.constant 0 : index
      %c0_13 = arith.constant 0 : index
      %15 = vector.load %arg7[%c0_12, %c0_13] : memref<8x128xf32, #tpu.memory_space<vmem>>, vector<8x128xf32>
      tpu.vector_store %arg7[%c0_12, %c0_13], %14 {strides = array<i32>} : memref<8x128xf32, #tpu.memory_space<vmem>>, vector<8x128xf32>,
    } else {
    }
    %c0 = arith.constant 0 : index
    %c0_1 = arith.constant 0 : index
    %3 = vector.load %arg7[%c0, %c0_1] : memref<8x128xf32, #tpu.memory_space<vmem>>, vector<8x128xf32>
    %c0_2 = arith.constant 0 : index
    %c0_3 = arith.constant 0 : index
    %4 = vector.load %arg3[%c0_2, %c0_3] : memref<8x128xf32, #tpu.memory_space<vmem>>, vector<8x128xf32>
    %c0_4 = arith.constant 0 : index
    %c0_5 = arith.constant 0 : index
    %5 = vector.load %arg4[%c0_4, %c0_5] : memref<128x128xf32, #tpu.memory_space<vmem>>, vector<128x128xf32>
    %cst = arith.constant dense<0.000000e+00> : vector<8x128xf32>
    %6 = tpu.matmul %4, %5, %cst {dimension_numbers = #tpu.dot_dimension_numbers<[1], [0], [0], [1], [0, 0, 1, 1], [], []>} : vector<8x128xf32>, vector<128x128xf32>, vector<8x128xf32> -> vector<8x128xf32>
    %7 = arith.addf %3, %6 : vector<8x128xf32>
    %c0_6 = arith.constant 0 : index
    %c0_7 = arith.constant 0 : index
    %8 = vector.load %arg7[%c0_6, %c0_7] : memref<8x128xf32, #tpu.memory_space<vmem>>, vector<8x128xf32>
    tpu.vector_store %arg7[%c0_6, %c0_7], %7 {strides = array<i32>} : memref<8x128xf32, #tpu.memory_space<vmem>>, vector<8x128xf32>,
    %c0_i32_8 = arith.constant 0 : i32
    %9 = arith.cmpi eq, %arg2, %c0_i32_8 : i32
    %10 = arith.extui %9 : i1 to i32
    %c0_i32_9 = arith.constant 0 : i32
    %11 = arith.cmpi ne, %10, %c0_i32_9 : i32
    scf.if %11 {
      %c0_10 = arith.constant 0 : index
      %c0_11 = arith.constant 0 : index
      %12 = vector.load %arg7[%c0_10, %c0_11] : memref<8x128xf32, #tpu.memory_space<vmem>>, vector<8x128xf32>
      %c0_12 = arith.constant 0 : index
      %c0_13 = arith.constant 0 : index
      %13 = vector.load %arg6[%c0_12, %c0_13] : memref<8x128xf32, #tpu.memory_space<vmem>>, vector<8x128xf32>
      tpu.vector_store %arg6[%c0_12, %c0_13], %12 {strides = array<i32>} : memref<8x128xf32, #tpu.memory_space<vmem>>, vector<8x128xf32>,
    } else {
    }
    return
  }
  func.func @transform_0(%arg0: i32, %arg1: i32, %arg2: i32) -> (i32, i32) {
    %c0_i32 = arith.constant 0 : i32
    return %arg0, %arg2 : i32, i32
  }
  func.func @transform_1(%arg0: i32, %arg1: i32, %arg2: i32) -> (i32, i32) {
    %c0_i32 = arith.constant 0 : i32
    return %arg2, %arg1 : i32, i32
  }
  func.func @transform_2(%arg0: i32, %arg1: i32, %arg2: i32) -> (i32, i32) {
    %c0_i32 = arith.constant 0 : i32
    %c0_i32_0 = arith.constant 0 : i32
    return %c0_i32, %arg1 : i32, i32
  }
  func.func @transform_3(%arg0: i32, %arg1: i32, %arg2: i32) -> (i32, i32) {
    %c0_i32 = arith.constant 0 : i32
    return %arg0, %arg1 : i32, i32
  }
}

</mosaic_0001>

<llo_original>
// kernel: pallas_linear.1
$region0: #{pallas_linear.1}
  #allocation0 [shape = 'u32[]', space=smem, size = 0x4, offset = 0x4, fixed_abs, tag = 'smem constant byte address 0x4 - core index']
  #allocation1 [shape = 'u32[72,128]{1,0:T(1,128)}', space=vmem, size = 0x9000, scoped, tag = 'internal scratch']
  #allocation2 [shape = 'f32[8,128]{1,0:T(8,128)}', space=vmem, size = 0x1000, scoped, tag = 'scratch operand']
  %s0 = inlined_call_operand.vmem [shape: f32[8,128], index: 0, kind: input, shape index: {}]
  %s1 = inlined_call_operand.hbm [shape: f32[128,128], index: 1, kind: input, shape index: {}]
  %s2 = inlined_call_operand.vmem [shape: f32[1,128], index: 2, kind: input, shape index: {}]
  %s3 = inlined_call_operand.hbm [shape: f32[8,128], index: 3, kind: output, shape index: {}]
  %s4 = sld [smem:[#allocation0]]
  $region34: #{pallas_linear.1} parent=0
    _
  %s6 = ssub.s32 1, %s4
  %s7 = scalar_select 0, %s6, %s4
  $region1: #{pallas_linear.1} parent=0
    #allocation3 [shape = 'u8[65536]{0}', space=vmem, size = 0x10000, scoped, tag = 'input window, operand 1, single buffered']
    #allocation4 [shape = 's32[1]{0}', space=sflag, size = 0x4, scoped, tag = 'scoped memory for pallas_linear.1']
    #allocation5 [shape = 's32[1]{0}', space=sflag, size = 0x4, scoped, tag = 'scoped memory for pallas_linear.1']
    #allocation6 [shape = 'u8[4096]{0}', space=vmem, size = 0x1000, scoped, tag = 'output window, operand 0, single buffered']
    %8 = vsyncpa [#allocation4], 0
    %9 = vsyncpa [#allocation5], 0
    // Predicated region
    $region2: #{pallas_linear.1} parent=1 // pred_check
      _
    $region3: #{pallas_linear.1} parent=1 // pred_check_branch
      %11 = sbr.rel (0) target = $region5
    $region4: #{pallas_linear.1} parent=1 // pred_region
      _
    $region5: #{pallas_linear.1} parent=1 // pred_fallthru
      _
    // Predicated region
    $region6: #{pallas_linear.1} parent=1 // pred_check
      _
    $region7: #{pallas_linear.1} parent=1 // pred_check_branch
      %13 = sbr.rel (0) target = $region9
    $region8: #{pallas_linear.1} parent=1 // pred_region
      %15 = vsyncadd [#allocation4], 0
      %s16 = sshll.u32 %s1, 4
      %s17 = int_to_ptr.hbm [resolvable:$true] %s16
      %s18 = sshll.u32 [#allocation3], 4
      %s19 = int_to_ptr.vmem [resolvable:$true] %s18
      %24 = dma.hbm_to_vmem [thread:$0]  %s17, 2048, %s19, [#allocation4], 128, 128, 8
    $region9: #{pallas_linear.1} parent=1 // pred_fallthru
      _
    // Predicated region
    $region10: #{pallas_linear.1} parent=1 // pred_check
      _
    $region11: #{pallas_linear.1} parent=1 // pred_check_branch
      %26 = sbr.rel (0) target = $region13
    $region12: #{pallas_linear.1} parent=1 // pred_region
      _
    $region13: #{pallas_linear.1} parent=1 // pred_fallthru
      _
    // Predicated region
    $region14: #{pallas_linear.1} parent=1 // pred_check
      _
    $region15: #{pallas_linear.1} parent=1 // pred_check_branch
      %28 = sbr.rel (0) target = $region17
    $region16: #{pallas_linear.1} parent=1 // pred_region
      %30 = dma.done [#allocation4], 2048
    $region17: #{pallas_linear.1} parent=1 // pred_fallthru
      _
    %p31 = scmp.eq.s32.totalorder 0, 0
    // Predicated region
    $region18: #{pallas_linear.1} parent=1 // pred_check
      %p32 = pneg %p31
    $region19: #{pallas_linear.1} parent=1 // pred_check_branch
      %34 = sbr.rel (%p32) target = $region21
    $region20: #{pallas_linear.1} parent=1 // pred_region
      %v35 = vld [vmem:[%s2] sm:$0x1]
      %v37 = vperm.slane %v35, 0
      %39 = vst [vmem:[#allocation2] sm:$0xff] %v37
    $region21: #{pallas_linear.1} parent=1 // pred_fallthru
      _
    %v40 = vld [vmem:[#allocation2] sm:$0xff]
    %v41 = vld [vmem:[%s0] sm:$0xff]
    %v42 = vld [vmem:[#allocation3] sm:$0xff]
    %v43 = vld [vmem:[#allocation3 + $0x8] sm:$0xff]
    %v44 = vld [vmem:[#allocation3 + $0x10] sm:$0xff]
    %v45 = vld [vmem:[#allocation3 + $0x18] sm:$0xff]
    %v46 = vld [vmem:[#allocation3 + $0x20] sm:$0xff]
    %v47 = vld [vmem:[#allocation3 + $0x28] sm:$0xff]
    %v48 = vld [vmem:[#allocation3 + $0x30] sm:$0xff]
    %v49 = vld [vmem:[#allocation3 + $0x38] sm:$0xff]
    %v50 = vld [vmem:[#allocation3 + $0x40] sm:$0xff]
    %v51 = vld [vmem:[#allocation3 + $0x48] sm:$0xff]
    %v52 = vld [vmem:[#allocation3 + $0x50] sm:$0xff]
    %v53 = vld [vmem:[#allocation3 + $0x58] sm:$0xff]
    %v54 = vld [vmem:[#allocation3 + $0x60] sm:$0xff]
    %v55 = vld [vmem:[#allocation3 + $0x68] sm:$0xff]
    %v56 = vld [vmem:[#allocation3 + $0x70] sm:$0xff]
    %v57 = vld [vmem:[#allocation3 + $0x78] sm:$0xff]
    %58 = vmatpush.msra.mxu0 %v57
    %59 = vmatpush.msra.mxu0 %v56
    %60 = vmatpush.msra.mxu0 %v55
    %61 = vmatpush.msra.mxu0 %v54
    %62 = vmatpush.msra.mxu0 %v53
    %63 = vmatpush.msra.mxu0 %v52
    %64 = vmatpush.msra.mxu0 %v51
    %65 = vmatpush.msra.mxu0 %v50
    %66 = vmatpush.msra.mxu0 %v49
    %67 = vmatpush.msra.mxu0 %v48
    %68 = vmatpush.msra.mxu0 %v47
    %69 = vmatpush.msra.mxu0 %v46
    %70 = vmatpush.msra.mxu0 %v45
    %71 = vmatpush.msra.mxu0 %v44
    %72 = vmatpush.msra.mxu0 %v43
    %73 = vmatpush.msra.mxu0 %v42
    %74 = vmatmul.f32.gmra.mxu0 %v41
    %v75 = vpop.f32.mrf.mxu0
    %v76 = vadd.f32 0.0, %v75
    %77 = vdwg.mxu0
    %v78 = vadd.f32 %v40, %v76
    %79 = vst [vmem:[#allocation2] sm:$0xff] %v78
    // Predicated region
    $region22: #{pallas_linear.1} parent=1 // pred_check
      %p80 = pneg %p31
    $region23: #{pallas_linear.1} parent=1 // pred_check_branch
      %82 = sbr.rel (%p80) target = $region25
    $region24: #{pallas_linear.1} parent=1 // pred_region
      %v83 = vld [vmem:[#allocation2] sm:$0xff]
      %84 = vst [vmem:[#allocation6] sm:$0xff] %v83
    $region25: #{pallas_linear.1} parent=1 // pred_fallthru
      _
    // Predicated region
    $region26: #{pallas_linear.1} parent=1 // pred_check
      _
    $region27: #{pallas_linear.1} parent=1 // pred_check_branch
      %86 = sbr.rel (0) target = $region29
    $region28: #{pallas_linear.1} parent=1 // pred_region
      %88 = vsyncadd [#allocation5], 0
      %s90 = sshll.u32 [#allocation6], 4
      %s91 = int_to_ptr.vmem [resolvable:$true] %s90
      %s92 = sshll.u32 %s3, 4
      %s93 = int_to_ptr.hbm [resolvable:$true] %s92
      %95 = dma.vmem_to_hbm [thread:$0]  %s91, 128, %s93, [#allocation5]
    $region29: #{pallas_linear.1} parent=1 // pred_fallthru
      _
    // Predicated region
    $region30: #{pallas_linear.1} parent=1 // pred_check
      _
    $region31: #{pallas_linear.1} parent=1 // pred_check_branch
      %97 = sbr.rel (0) target = $region33
    $region32: #{pallas_linear.1} parent=1 // pred_region
      %99 = dma.done [#allocation5], 128
    $region33: #{pallas_linear.1} parent=1 // pred_fallthru
      _
    %100 = vsyncpa [#allocation4], 1
    %101 = vsyncpa [#allocation5], 1

</llo_original>
